<compile_context>
chip_gen: v6e
topology: v6e:2x2x1
jax: 0.10.0
libtpu: 0.0.40
codegen_flags: <defaults>
</compile_context>

<pallas_src>
import functools

import jax
import jax.numpy as jnp
from jax.experimental import pallas as pl
from jax.experimental.pallas import tpu as pltpu


def _round_up(x, m):
    return (x + m - 1) // m * m


def _vmem_capacity_bytes():
    """Physical per-core VMEM capacity; conservative fallback if unqueryable."""
    try:
        cap = int(pltpu.get_tpu_info().vmem_capacity_bytes)
        if cap > 0:
            return cap
    except Exception:
        pass
    return 64 * 1024 * 1024  # v7x-sized fallback: safe on every generation


def _elman_rnn_kernel(xp_ref, whh_hbm_ref, out_ref, h_scratch, whh_vmem,
                      *, tc, tc_last, hoist_whh):
    """Chunked Elman recurrence.

    xp_ref      : (Tc, Bs, Hp)  x_t @ W_ih^T + (b_ih + b_hh), time-major chunk
    whh_hbm_ref : (Hp, Hp)      W_hh^T in HBM (memory_space=ANY, zero-padded)
    out_ref     : (Tc, Bs, Hp)  hidden states for this chunk
    h_scratch   : (Bs, Hp) f32  carried hidden state (persists across chunks)
    whh_vmem    : (Hp, Hp)      single-buffered VMEM copy of W_hh^T
    """
    t = pl.program_id(1)

    @pl.when(t == 0)
    def _():
        # h_0 = zeros (matches ElmanRNN._initial_hidden when initial_hidden=None)
        h_scratch[...] = jnp.zeros_like(h_scratch)
        # Copy W_hh^T once into VMEM; the scratch persists across all chunks.
        pltpu.sync_copy(whh_hbm_ref, whh_vmem)

    def run_chunk(nsteps):
        # Hoist the weight into vregs only when it comfortably fits (Hp <= 128,
        # i.e. <= 16 vregs f32); otherwise keep it ref-resident per step.
        whh_hoisted = whh_vmem[...] if hoist_whh else None

        def step(i, h):
            w = whh_hoisted if hoist_whh else whh_vmem[...]
            pre = xp_ref[i].astype(jnp.float32) + jnp.dot(
                h.astype(w.dtype), w, preferred_element_type=jnp.float32)
            h_new = jnp.tanh(pre)                     # f32 tanh (v5e-safe)
            out_ref[i] = h_new.astype(out_ref.dtype)
            return h_new

        # h lives in vregs across the chunk; one scratch read + write per chunk.
        h0 = h_scratch[...]
        h_final = jax.lax.fori_loop(0, nsteps, step, h0,
                                    unroll=True if nsteps <= 16 else 8)
        h_scratch[...] = h_final

    if tc_last == tc:
        run_chunk(tc)
    else:
        is_last = t == pl.num_programs(1) - 1

        @pl.when(jnp.logical_not(is_last))
        def _():
            run_chunk(tc)

        @pl.when(is_last)
        def _():
            run_chunk(tc_last)     # skip zero-padded tail timesteps


@functools.partial(jax.jit, static_argnames=("batch_first", "use_bf16"))
def elman_rnn_forward(x_in, w_ih, w_hh, b_ih, b_hh, *, batch_first=False,
                      use_bf16=False):
    """Pallas Elman RNN forward.

    x_in: (batch, seq, feature) if batch_first else (seq, batch, feature)
    w_ih: (hidden, input), w_hh: (hidden, hidden), b_ih/b_hh: (hidden,)
    Returns hiddens with the same time/batch ordering as the input.
    """
    hidden, feat = w_ih.shape
    if batch_first:
        batch, seq, _ = x_in.shape
    else:
        seq, batch, _ = x_in.shape

    store_dtype = jnp.bfloat16 if use_bf16 else jnp.float32
    xbytes = 2 if use_bf16 else 4

    # Lane-dense hidden dim (multiple of 128).  Zero-padded lanes stay zero
    # through the recurrence (zero weights/bias, tanh(0)=0).
    hp = _round_up(max(hidden, 128), 128)

    wih_t = jnp.zeros((feat, hp), jnp.float32).at[:, :hidden].set(
        jnp.transpose(w_ih).astype(jnp.float32))
    whh_t = jnp.zeros((hp, hp), jnp.float32).at[:hidden, :hidden].set(
        jnp.transpose(w_hh).astype(jnp.float32)).astype(store_dtype)
    bias = jnp.zeros((hp,), jnp.float32).at[:hidden].set(
        (b_ih + b_hh).astype(jnp.float32))

    # Non-recurrent projection: one big MXU-friendly matmul, emitted directly
    # in the time-major layout the kernel consumes (biases folded in).
    if batch_first:
        x_proj = jnp.einsum('bsf,fh->sbh', x_in.astype(jnp.float32), wih_t) + bias
    else:
        x_proj = jnp.einsum('sbf,fh->sbh', x_in.astype(jnp.float32), wih_t) + bias
    x_proj = x_proj.astype(store_dtype)              # (seq, batch, hp)

    # Pad batch to a sublane multiple only when it is large and ragged.
    bp = _round_up(batch, 8) if batch > 8 else batch

    # Optional batch sharding across TensorCores (v7x megacore): leading
    # "parallel" grid axis over independent batch halves.
    shards = 2 if (bp >= 16 and bp % 16 == 0) else 1
    bs = bp // shards

    # Generation-aware chunk sizing: largest Tc whose working set fits in a
    # fraction of this device's physical VMEM.
    cap = _vmem_capacity_bytes()
    budget = int(cap * 0.6)
    fixed = hp * hp * xbytes + bs * hp * 4                     # W_hh + h scratch
    per_step = 2 * bs * hp * xbytes + 2 * bs * hp * 4          # in + out (double-buffered)
    tc = int(max(1, min(seq, (budget - fixed) // per_step, 512)))
    n_chunks = -(-seq // tc)
    seq_pad = n_chunks * tc
    tc_last = seq - (n_chunks - 1) * tc

    pad_s, pad_b = seq_pad - seq, bp - batch
    if pad_s or pad_b:
        x_proj = jnp.pad(x_proj, ((0, pad_s), (0, pad_b), (0, 0)))

    needed = fixed + per_step * tc + (1 << 20)
    vmem_limit = int(min(max(2 * needed, 32 * 1024 * 1024), int(cap * 0.85)))

    kernel = functools.partial(_elman_rnn_kernel, tc=tc, tc_last=tc_last,
                               hoist_whh=(hp <= 128))

    out = pl.pallas_call(
        kernel,
        out_shape=jax.ShapeDtypeStruct((seq_pad, bp, hp), jnp.float32),
        grid_spec=pltpu.PrefetchScalarGridSpec(
            num_scalar_prefetch=0,
            grid=(shards, n_chunks),
            in_specs=[
                pl.BlockSpec((tc, bs, hp), lambda s, c: (c, s, 0)),
                pl.BlockSpec(memory_space=pl.ANY),      # W_hh^T stays in HBM
            ],
            out_specs=pl.BlockSpec((tc, bs, hp), lambda s, c: (c, s, 0)),
            scratch_shapes=[
                pltpu.VMEM((bs, hp), jnp.float32),      # carried hidden state
                pltpu.VMEM((hp, hp), store_dtype),      # single-buffered W_hh^T
            ],
        ),
        compiler_params=pltpu.CompilerParams(
            dimension_semantics=("parallel", "arbitrary"),
            vmem_limit_bytes=vmem_limit,
        ),
    )(x_proj, whh_t)

    out = out[:seq, :batch, :hidden]
    if batch_first:
        out = jnp.swapaxes(out, 0, 1)                  # -> (batch, seq, hidden)
    return out.astype(x_in.dtype)


def _reference_elman_rnn(x_in, w_ih, w_hh, b_ih, b_hh, *, batch_first=False):
    """Pure-JAX reference matching torch.nn.RNNCell unrolled (tanh)."""
    x_tm = jnp.transpose(x_in, (1, 0, 2)) if batch_first else x_in
    seq, batch, _ = x_tm.shape
    h = jnp.zeros((batch, w_ih.shape[0]), jnp.float32)

    def step(h, x_t):
        h = jnp.tanh(x_t @ w_ih.T + b_ih + h @ w_hh.T + b_hh)
        return h, h

    _, hs = jax.lax.scan(step, h, x_tm)
    if batch_first:
        hs = jnp.transpose(hs, (1, 0, 2))
    return hs.astype(x_in.dtype)


if __name__ == "__main__":
    # Small, module-consistent shapes: batch=2, seq=8, input_size=4, hidden=32
    batch, seq, input_size, hidden_size = 2, 8, 4, 32

    key = jax.random.PRNGKey(0)
    kx, k1, k2, k3, k4 = jax.random.split(key, 5)

    # Deterministic parameter init (PyTorch RNNCell-style uniform(-1/sqrt(H), 1/sqrt(H)))
    bound = 1.0 / jnp.sqrt(jnp.float32(hidden_size))
    w_ih = jax.random.uniform(k1, (hidden_size, input_size), jnp.float32, -bound, bound)
    w_hh = jax.random.uniform(k2, (hidden_size, hidden_size), jnp.float32, -bound, bound)
    b_ih = jax.random.uniform(k3, (hidden_size,), jnp.float32, -bound, bound)
    b_hh = jax.random.uniform(k4, (hidden_size,), jnp.float32, -bound, bound)

    x_bf = jax.random.normal(kx, (batch, seq, input_size), jnp.float32)

    # batch_first=True path
    out_bf = elman_rnn_forward(x_bf, w_ih, w_hh, b_ih, b_hh, batch_first=True)
    out_bf = jax.block_until_ready(out_bf)
    ref_bf = _reference_elman_rnn(x_bf, w_ih, w_hh, b_ih, b_hh, batch_first=True)
    assert out_bf.shape == (batch, seq, hidden_size), out_bf.shape
    assert jnp.allclose(out_bf, ref_bf, atol=1e-5, rtol=1e-5), "mismatch (batch_first=True)"

    # batch_first=False path
    x_tm = jnp.transpose(x_bf, (1, 0, 2))
    out_tm = elman_rnn_forward(x_tm, w_ih, w_hh, b_ih, b_hh, batch_first=False)
    out_tm = jax.block_until_ready(out_tm)
    ref_tm = _reference_elman_rnn(x_tm, w_ih, w_hh, b_ih, b_hh, batch_first=False)
    assert out_tm.shape == (seq, batch, hidden_size), out_tm.shape
    assert jnp.allclose(out_tm, ref_tm, atol=1e-5, rtol=1e-5), "mismatch (batch_first=False)"

    print("KERNEL_OK")
</pallas_src>

<mosaic_0001>
module attributes {stable_mosaic.version = 11 : i64} {
  func.func @_elman_rnn_kernel(%arg0: i32, %arg1: i32, %arg2: memref<8x2x128xf32, #tpu.memory_space<vmem>>, %arg3: memref<128x128xf32, #tpu.memory_space<any>>, %arg4: memref<8x2x128xf32, #tpu.memory_space<vmem>>, %arg5: memref<2x128xf32, #tpu.memory_space<vmem>>, %arg6: memref<128x128xf32, #tpu.memory_space<vmem>>) attributes {dimension_semantics = [#tpu.dimension_semantics<parallel>, #tpu.dimension_semantics<arbitrary>], iteration_bounds = array<i64: 1, 1>, scalar_prefetch = 0 : i64, scratch_operands = 2 : i64, tpu.core_type = #tpu.core_type<tc>, window_params = [{transform_indices = @transform_0, window_bounds = array<i64: 8, 2, 128>}, {}, {transform_indices = @transform_2, window_bounds = array<i64: 8, 2, 128>}]} {
    %c0_i32 = arith.constant 0 : i32
    %0 = arith.cmpi eq, %arg1, %c0_i32 : i32
    %1 = arith.extui %0 : i1 to i32
    %c0_i32_0 = arith.constant 0 : i32
    %2 = arith.cmpi ne, %1, %c0_i32_0 : i32
    scf.if %2 {
      %cst_46 = arith.constant 0.000000e+00 : f32
      %86 = vector.broadcast %cst_46 : f32 to vector<2x128xf32>
      %c0_47 = arith.constant 0 : index
      %c0_48 = arith.constant 0 : index
      %87 = vector.load %arg5[%c0_47, %c0_48] : memref<2x128xf32, #tpu.memory_space<vmem>>, vector<2x128xf32>
      tpu.vector_store %arg5[%c0_47, %c0_48], %86 {strides = array<i32>} : memref<2x128xf32, #tpu.memory_space<vmem>>, vector<2x128xf32>,
      "tpu.region"() ({
        %88 = tpu.sem_alloc : memref<!tpu.dma_semaphore, #tpu.memory_space<semaphore_mem>>
        tpu.enqueue_dma source(%arg3 : memref<128x128xf32, #tpu.memory_space<any>>) target(%arg6 : memref<128x128xf32, #tpu.memory_space<vmem>>) target_semaphore(%88 : memref<!tpu.dma_semaphore, #tpu.memory_space<semaphore_mem>>)
        tpu.wait_dma2 semaphore(%88 : memref<!tpu.dma_semaphore, #tpu.memory_space<semaphore_mem>>) src(%arg3 : memref<128x128xf32, #tpu.memory_space<any>>) dst(%arg6 : memref<128x128xf32, #tpu.memory_space<vmem>>)
        tpu.yield
      }) : () -> ()
    } else {
    }
    %c0 = arith.constant 0 : index
    %c0_1 = arith.constant 0 : index
    %3 = vector.load %arg6[%c0, %c0_1] : memref<128x128xf32, #tpu.memory_space<vmem>>, vector<128x128xf32>
    %c0_2 = arith.constant 0 : index
    %c0_3 = arith.constant 0 : index
    %4 = vector.load %arg5[%c0_2, %c0_3] : memref<2x128xf32, #tpu.memory_space<vmem>>, vector<2x128xf32>
    %c0_i32_4 = arith.constant 0 : i32
    %5 = arith.index_cast %c0_i32_4 : i32 to index
    %c0_5 = arith.constant 0 : index
    %c0_6 = arith.constant 0 : index
    %6 = vector.load %arg2[%5, %c0_5, %c0_6] : memref<8x2x128xf32, #tpu.memory_space<vmem>>, vector<1x2x128xf32>
    %7 = vector.shape_cast %6 : vector<1x2x128xf32> to vector<2x128xf32>
    %cst = arith.constant dense<0.000000e+00> : vector<2x128xf32>
    %8 = tpu.matmul %4, %3, %cst {dimension_numbers = #tpu.dot_dimension_numbers<[1], [0], [0], [1], [0, 0, 1, 1], [], []>} : vector<2x128xf32>, vector<128x128xf32>, vector<2x128xf32> -> vector<2x128xf32>
    %9 = arith.addf %7, %8 : vector<2x128xf32>
    %10 = math.tanh %9 : vector<2x128xf32>
    %11 = arith.index_cast %c0_i32_4 : i32 to index
    %c0_7 = arith.constant 0 : index
    %c0_8 = arith.constant 0 : index
    %12 = vector.load %arg4[%11, %c0_7, %c0_8] : memref<8x2x128xf32, #tpu.memory_space<vmem>>, vector<1x2x128xf32>
    %13 = vector.shape_cast %12 : vector<1x2x128xf32> to vector<2x128xf32>
    %14 = vector.shape_cast %10 : vector<2x128xf32> to vector<1x2x128xf32>
    tpu.vector_store %arg4[%11, %c0_7, %c0_8], %14 {strides = array<i32>} : memref<8x2x128xf32, #tpu.memory_space<vmem>>, vector<1x2x128xf32>,
    %c1_i32 = arith.constant 1 : i32
    %15 = arith.index_cast %c1_i32 : i32 to index
    %c0_9 = arith.constant 0 : index
    %c0_10 = arith.constant 0 : index
    %16 = vector.load %arg2[%15, %c0_9, %c0_10] : memref<8x2x128xf32, #tpu.memory_space<vmem>>, vector<1x2x128xf32>
    %17 = vector.shape_cast %16 : vector<1x2x128xf32> to vector<2x128xf32>
    %cst_11 = arith.constant dense<0.000000e+00> : vector<2x128xf32>
    %18 = tpu.matmul %10, %3, %cst_11 {dimension_numbers = #tpu.dot_dimension_numbers<[1], [0], [0], [1], [0, 0, 1, 1], [], []>} : vector<2x128xf32>, vector<128x128xf32>, vector<2x128xf32> -> vector<2x128xf32>
    %19 = arith.addf %17, %18 : vector<2x128xf32>
    %20 = math.tanh %19 : vector<2x128xf32>
    %21 = arith.index_cast %c1_i32 : i32 to index
    %c0_12 = arith.constant 0 : index
    %c0_13 = arith.constant 0 : index
    %22 = vector.load %arg4[%21, %c0_12, %c0_13] : memref<8x2x128xf32, #tpu.memory_space<vmem>>, vector<1x2x128xf32>
    %23 = vector.shape_cast %22 : vector<1x2x128xf32> to vector<2x128xf32>
    %24 = vector.shape_cast %20 : vector<2x128xf32> to vector<1x2x128xf32>
    tpu.vector_store %arg4[%21, %c0_12, %c0_13], %24 {strides = array<i32>} : memref<8x2x128xf32, #tpu.memory_space<vmem>>, vector<1x2x128xf32>,
    %c2_i32 = arith.constant 2 : i32
    %25 = arith.index_cast %c2_i32 : i32 to index
    %c0_14 = arith.constant 0 : index
    %c0_15 = arith.constant 0 : index
    %26 = vector.load %arg2[%25, %c0_14, %c0_15] : memref<8x2x128xf32, #tpu.memory_space<vmem>>, vector<1x2x128xf32>
    %27 = vector.shape_cast %26 : vector<1x2x128xf32> to vector<2x128xf32>
    %cst_16 = arith.constant dense<0.000000e+00> : vector<2x128xf32>
    %28 = tpu.matmul %20, %3, %cst_16 {dimension_numbers = #tpu.dot_dimension_numbers<[1], [0], [0], [1], [0, 0, 1, 1], [], []>} : vector<2x128xf32>, vector<128x128xf32>, vector<2x128xf32> -> vector<2x128xf32>
    %29 = arith.addf %27, %28 : vector<2x128xf32>
    %30 = math.tanh %29 : vector<2x128xf32>
    %31 = arith.index_cast %c2_i32 : i32 to index
    %c0_17 = arith.constant 0 : index
    %c0_18 = arith.constant 0 : index
    %32 = vector.load %arg4[%31, %c0_17, %c0_18] : memref<8x2x128xf32, #tpu.memory_space<vmem>>, vector<1x2x128xf32>
    %33 = vector.shape_cast %32 : vector<1x2x128xf32> to vector<2x128xf32>
    %34 = vector.shape_cast %30 : vector<2x128xf32> to vector<1x2x128xf32>
    tpu.vector_store %arg4[%31, %c0_17, %c0_18], %34 {strides = array<i32>} : memref<8x2x128xf32, #tpu.memory_space<vmem>>, vector<1x2x128xf32>,
    %c3_i32 = arith.constant 3 : i32
    %35 = arith.index_cast %c3_i32 : i32 to index
    %c0_19 = arith.constant 0 : index
    %c0_20 = arith.constant 0 : index
    %36 = vector.load %arg2[%35, %c0_19, %c0_20] : memref<8x2x128xf32, #tpu.memory_space<vmem>>, vector<1x2x128xf32>
    %37 = vector.shape_cast %36 : vector<1x2x128xf32> to vector<2x128xf32>
    %cst_21 = arith.constant dense<0.000000e+00> : vector<2x128xf32>
    %38 = tpu.matmul %30, %3, %cst_21 {dimension_numbers = #tpu.dot_dimension_numbers<[1], [0], [0], [1], [0, 0, 1, 1], [], []>} : vector<2x128xf32>, vector<128x128xf32>, vector<2x128xf32> -> vector<2x128xf32>
    %39 = arith.addf %37, %38 : vector<2x128xf32>
    %40 = math.tanh %39 : vector<2x128xf32>
    %41 = arith.index_cast %c3_i32 : i32 to index
    %c0_22 = arith.constant 0 : index
    %c0_23 = arith.constant 0 : index
    %42 = vector.load %arg4[%41, %c0_22, %c0_23] : memref<8x2x128xf32, #tpu.memory_space<vmem>>, vector<1x2x128xf32>
    %43 = vector.shape_cast %42 : vector<1x2x128xf32> to vector<2x128xf32>
    %44 = vector.shape_cast %40 : vector<2x128xf32> to vector<1x2x128xf32>
    tpu.vector_store %arg4[%41, %c0_22, %c0_23], %44 {strides = array<i32>} : memref<8x2x128xf32, #tpu.memory_space<vmem>>, vector<1x2x128xf32>,
    %c4_i32 = arith.constant 4 : i32
    %45 = arith.index_cast %c4_i32 : i32 to index
    %c0_24 = arith.constant 0 : index
    %c0_25 = arith.constant 0 : index
    %46 = vector.load %arg2[%45, %c0_24, %c0_25] : memref<8x2x128xf32, #tpu.memory_space<vmem>>, vector<1x2x128xf32>
    %47 = vector.shape_cast %46 : vector<1x2x128xf32> to vector<2x128xf32>
    %cst_26 = arith.constant dense<0.000000e+00> : vector<2x128xf32>
    %48 = tpu.matmul %40, %3, %cst_26 {dimension_numbers = #tpu.dot_dimension_numbers<[1], [0], [0], [1], [0, 0, 1, 1], [], []>} : vector<2x128xf32>, vector<128x128xf32>, vector<2x128xf32> -> vector<2x128xf32>
    %49 = arith.addf %47, %48 : vector<2x128xf32>
    %50 = math.tanh %49 : vector<2x128xf32>
    %51 = arith.index_cast %c4_i32 : i32 to index
    %c0_27 = arith.constant 0 : index
    %c0_28 = arith.constant 0 : index
    %52 = vector.load %arg4[%51, %c0_27, %c0_28] : memref<8x2x128xf32, #tpu.memory_space<vmem>>, vector<1x2x128xf32>
    %53 = vector.shape_cast %52 : vector<1x2x128xf32> to vector<2x128xf32>
    %54 = vector.shape_cast %50 : vector<2x128xf32> to vector<1x2x128xf32>
    tpu.vector_store %arg4[%51, %c0_27, %c0_28], %54 {strides = array<i32>} : memref<8x2x128xf32, #tpu.memory_space<vmem>>, vector<1x2x128xf32>,
    %c5_i32 = arith.constant 5 : i32
    %55 = arith.index_cast %c5_i32 : i32 to index
    %c0_29 = arith.constant 0 : index
    %c0_30 = arith.constant 0 : index
    %56 = vector.load %arg2[%55, %c0_29, %c0_30] : memref<8x2x128xf32, #tpu.memory_space<vmem>>, vector<1x2x128xf32>
    %57 = vector.shape_cast %56 : vector<1x2x128xf32> to vector<2x128xf32>
    %cst_31 = arith.constant dense<0.000000e+00> : vector<2x128xf32>
    %58 = tpu.matmul %50, %3, %cst_31 {dimension_numbers = #tpu.dot_dimension_numbers<[1], [0], [0], [1], [0, 0, 1, 1], [], []>} : vector<2x128xf32>, vector<128x128xf32>, vector<2x128xf32> -> vector<2x128xf32>
    %59 = arith.addf %57, %58 : vector<2x128xf32>
    %60 = math.tanh %59 : vector<2x128xf32>
    %61 = arith.index_cast %c5_i32 : i32 to index
    %c0_32 = arith.constant 0 : index
    %c0_33 = arith.constant 0 : index
    %62 = vector.load %arg4[%61, %c0_32, %c0_33] : memref<8x2x128xf32, #tpu.memory_space<vmem>>, vector<1x2x128xf32>
    %63 = vector.shape_cast %62 : vector<1x2x128xf32> to vector<2x128xf32>
    %64 = vector.shape_cast %60 : vector<2x128xf32> to vector<1x2x128xf32>
    tpu.vector_store %arg4[%61, %c0_32, %c0_33], %64 {strides = array<i32>} : memref<8x2x128xf32, #tpu.memory_space<vmem>>, vector<1x2x128xf32>,
    %c6_i32 = arith.constant 6 : i32
    %65 = arith.index_cast %c6_i32 : i32 to index
    %c0_34 = arith.constant 0 : index
    %c0_35 = arith.constant 0 : index
    %66 = vector.load %arg2[%65, %c0_34, %c0_35] : memref<8x2x128xf32, #tpu.memory_space<vmem>>, vector<1x2x128xf32>
    %67 = vector.shape_cast %66 : vector<1x2x128xf32> to vector<2x128xf32>
    %cst_36 = arith.constant dense<0.000000e+00> : vector<2x128xf32>
    %68 = tpu.matmul %60, %3, %cst_36 {dimension_numbers = #tpu.dot_dimension_numbers<[1], [0], [0], [1], [0, 0, 1, 1], [], []>} : vector<2x128xf32>, vector<128x128xf32>, vector<2x128xf32> -> vector<2x128xf32>
    %69 = arith.addf %67, %68 : vector<2x128xf32>
    %70 = math.tanh %69 : vector<2x128xf32>
    %71 = arith.index_cast %c6_i32 : i32 to index
    %c0_37 = arith.constant 0 : index
    %c0_38 = arith.constant 0 : index
    %72 = vector.load %arg4[%71, %c0_37, %c0_38] : memref<8x2x128xf32, #tpu.memory_space<vmem>>, vector<1x2x128xf32>
    %73 = vector.shape_cast %72 : vector<1x2x128xf32> to vector<2x128xf32>
    %74 = vector.shape_cast %70 : vector<2x128xf32> to vector<1x2x128xf32>
    tpu.vector_store %arg4[%71, %c0_37, %c0_38], %74 {strides = array<i32>} : memref<8x2x128xf32, #tpu.memory_space<vmem>>, vector<1x2x128xf32>,
    %c7_i32 = arith.constant 7 : i32
    %75 = arith.index_cast %c7_i32 : i32 to index
    %c0_39 = arith.constant 0 : index
    %c0_40 = arith.constant 0 : index
    %76 = vector.load %arg2[%75, %c0_39, %c0_40] : memref<8x2x128xf32, #tpu.memory_space<vmem>>, vector<1x2x128xf32>
    %77 = vector.shape_cast %76 : vector<1x2x128xf32> to vector<2x128xf32>
    %cst_41 = arith.constant dense<0.000000e+00> : vector<2x128xf32>
    %78 = tpu.matmul %70, %3, %cst_41 {dimension_numbers = #tpu.dot_dimension_numbers<[1], [0], [0], [1], [0, 0, 1, 1], [], []>} : vector<2x128xf32>, vector<128x128xf32>, vector<2x128xf32> -> vector<2x128xf32>
    %79 = arith.addf %77, %78 : vector<2x128xf32>
    %80 = math.tanh %79 : vector<2x128xf32>
    %81 = arith.index_cast %c7_i32 : i32 to index
    %c0_42 = arith.constant 0 : index
    %c0_43 = arith.constant 0 : index
    %82 = vector.load %arg4[%81, %c0_42, %c0_43] : memref<8x2x128xf32, #tpu.memory_space<vmem>>, vector<1x2x128xf32>
    %83 = vector.shape_cast %82 : vector<1x2x128xf32> to vector<2x128xf32>
    %84 = vector.shape_cast %80 : vector<2x128xf32> to vector<1x2x128xf32>
    tpu.vector_store %arg4[%81, %c0_42, %c0_43], %84 {strides = array<i32>} : memref<8x2x128xf32, #tpu.memory_space<vmem>>, vector<1x2x128xf32>,
    %c8_i32 = arith.constant 8 : i32
    %c0_44 = arith.constant 0 : index
    %c0_45 = arith.constant 0 : index
    %85 = vector.load %arg5[%c0_44, %c0_45] : memref<2x128xf32, #tpu.memory_space<vmem>>, vector<2x128xf32>
    tpu.vector_store %arg5[%c0_44, %c0_45], %80 {strides = array<i32>} : memref<2x128xf32, #tpu.memory_space<vmem>>, vector<2x128xf32>,
    return
  }
  func.func @transform_0(%arg0: i32, %arg1: i32) -> (i32, i32, i32) {
    %c0_i32 = arith.constant 0 : i32
    %c0_i32_0 = arith.constant 0 : i32
    return %arg1, %arg0, %c0_i32 : i32, i32, i32
  }
  func.func @transform_2(%arg0: i32, %arg1: i32) -> (i32, i32, i32) {
    %c0_i32 = arith.constant 0 : i32
    %c0_i32_0 = arith.constant 0 : i32
    return %arg1, %arg0, %c0_i32 : i32, i32, i32
  }
}

</mosaic_0001>

<llo_original>
// kernel: elman_rnn_forward.1
$region0: #{elman_rnn_forward.1}
  #allocation0 [shape = 'u32[]', space=smem, size = 0x4, offset = 0x4, fixed_abs, tag = 'smem constant byte address 0x4 - core index']
  #allocation1 [shape = 'u32[144,128]{1,0:T(1,128)}', space=vmem, size = 0x12000, scoped, tag = 'internal scratch']
  #allocation2 [shape = 'f32[2,128]{1,0:T(2,128)}', space=vmem, size = 0x400, scoped, tag = 'scratch operand']
  #allocation3 [shape = 'f32[128,128]{1,0:T(8,128)}', space=vmem, size = 0x10000, scoped, tag = 'scratch operand']
  #allocation5 [shape = 's32[]', space=sflag, size = 0x4, offset = 0, fixed_abs, tag = 'sflag constant byte address 0x0 - dummy sync flag']
  %s0 = inlined_call_operand.vmem [shape: f32[8,2,128], index: 0, kind: input, shape index: {}]
  %s1 = inlined_call_operand.vmem [shape: f32[128,128], index: 1, kind: input, shape index: {}]
  %s2 = inlined_call_operand.vmem [shape: f32[8,2,128], index: 2, kind: output, shape index: {}]
  %s3 = sld [smem:[#allocation0]]
  $region53: #{elman_rnn_forward.1} parent=0
    _
  %s5 = ssub.s32 1, %s3
  %s6 = scalar_select 0, %s5, %s3
  // Predicated region
  $region2: #{elman_rnn_forward.1} parent=0 // pred_check
    _
  $region3: #{elman_rnn_forward.1} parent=0 // pred_check_branch
    %8 = sbr.rel (0) target = $region5
  $region4: #{elman_rnn_forward.1} parent=0 // pred_region
    _
  $region5: #{elman_rnn_forward.1} parent=0 // pred_fallthru
    _
  %p9 = scmp.eq.s32.totalorder 0, 0
  // Predicated region
  $region6: #{elman_rnn_forward.1} parent=0 // pred_check
    %p10 = pneg %p9
  $region7: #{elman_rnn_forward.1} parent=0 // pred_check_branch
    %12 = sbr.rel (%p10) target = $region9
  $region8: #{elman_rnn_forward.1} parent=0 // pred_region
    %13 = vst [vmem:[#allocation2] sm:$0x3] 0.0
    $region10: #{elman_rnn_forward.1} parent=8
      #allocation4 [shape = 's32[1]{0}', space=sflag, size = 0x4, scoped, tag = 'scoped memory for elman_rnn_forward.1']
      %p15 = scmp.lt.u32.totalorder 128, 8
      %p16 = pneg %p15
      // Predicated region
      $region11: #{elman_rnn_forward.1} parent=10 // pred_check
        _
      $region12: #{elman_rnn_forward.1} parent=10 // pred_check_branch
        %18 = sbr.rel (%p15) target = $region14
      $region13: #{elman_rnn_forward.1} parent=10 // pred_region
        %s34 = sand.u32 128, 7
        %p35 = scmp.eq.s32.totalorder %s34, 0
        // Predicated region
        $region26: #{elman_rnn_forward.1} parent=13 // pred_check
          %p36 = pneg %p35
        $region27: #{elman_rnn_forward.1} parent=13 // pred_check_branch
          %38 = sbr.rel (%p36) target = $region29
        $region28: #{elman_rnn_forward.1} parent=13 // pred_region
          loop: start=0, step=1, limit=1
          $region30: #{elman_rnn_forward.1} parent=28 // loop_pre_header
            _
          $region31: #{elman_rnn_forward.1} parent=28 // loop_header
            %s40 = sphi 0, %s44
            %p41 = scmp.ge.s32.totalorder %s40, 1
            %s45 = sphi %s1, %s1
            %s46 = sphi [#allocation3], [#allocation3]
          $region32: #{elman_rnn_forward.1} parent=28 // loop_header_branch
            %43 = sbr.rel (%p41) target = $region36
          $region33: #{elman_rnn_forward.1} parent=28 // loop_body
            %v47 = vld [vmem:[%s45] sm:$0xff]
            %48 = vst [vmem:[%s46] sm:$0xff] %v47
            %v49 = vld [vmem:[%s45 + $0x8] sm:$0xff]
            %50 = vst [vmem:[%s46 + $0x8] sm:$0xff] %v49
            %v51 = vld [vmem:[%s45 + $0x10] sm:$0xff]
            %52 = vst [vmem:[%s46 + $0x10] sm:$0xff] %v51
            %v53 = vld [vmem:[%s45 + $0x18] sm:$0xff]
            %54 = vst [vmem:[%s46 + $0x18] sm:$0xff] %v53
            %v55 = vld [vmem:[%s45 + $0x20] sm:$0xff]
            %56 = vst [vmem:[%s46 + $0x20] sm:$0xff] %v55
            %v57 = vld [vmem:[%s45 + $0x28] sm:$0xff]
            %58 = vst [vmem:[%s46 + $0x28] sm:$0xff] %v57
            %v59 = vld [vmem:[%s45 + $0x30] sm:$0xff]
            %60 = vst [vmem:[%s46 + $0x30] sm:$0xff] %v59
            %v61 = vld [vmem:[%s45 + $0x38] sm:$0xff]
            %62 = vst [vmem:[%s46 + $0x38] sm:$0xff] %v61
            %v63 = vld [vmem:[%s45 + $0x40] sm:$0xff]
            %64 = vst [vmem:[%s46 + $0x40] sm:$0xff] %v63
            %v65 = vld [vmem:[%s45 + $0x48] sm:$0xff]
            %66 = vst [vmem:[%s46 + $0x48] sm:$0xff] %v65
            %v67 = vld [vmem:[%s45 + $0x50] sm:$0xff]
            %68 = vst [vmem:[%s46 + $0x50] sm:$0xff] %v67
            %v69 = vld [vmem:[%s45 + $0x58] sm:$0xff]
            %70 = vst [vmem:[%s46 + $0x58] sm:$0xff] %v69
            %v71 = vld [vmem:[%s45 + $0x60] sm:$0xff]
            %72 = vst [vmem:[%s46 + $0x60] sm:$0xff] %v71
            %v73 = vld [vmem:[%s45 + $0x68] sm:$0xff]
            %74 = vst [vmem:[%s46 + $0x68] sm:$0xff] %v73
            %v75 = vld [vmem:[%s45 + $0x70] sm:$0xff]
            %76 = vst [vmem:[%s46 + $0x70] sm:$0xff] %v75
            %v77 = vld [vmem:[%s45 + $0x78] sm:$0xff]
            %78 = vst [vmem:[%s46 + $0x78] sm:$0xff] %v77
          $region34: #{elman_rnn_forward.1} parent=28 // loop_footer
            %s44 = sadd.s32 1, %s40
          $region35: #{elman_rnn_forward.1} parent=28 // loop_footer_branch
            %39 = sbr.rel target = $region31
          $region36: #{elman_rnn_forward.1} parent=28 // loop_exit
            _
        $region29: #{elman_rnn_forward.1} parent=13 // pred_fallthru
          _
        %p79 = pneg %p35
        // Predicated region
        $region37: #{elman_rnn_forward.1} parent=13 // pred_check
          _
        $region38: #{elman_rnn_forward.1} parent=13 // pred_check_branch
          %81 = sbr.rel (%p35) target = $region40
        $region39: #{elman_rnn_forward.1} parent=13 // pred_region
          %s82 = sand.u32 128, 7
        $region40: #{elman_rnn_forward.1} parent=13 // pred_fallthru
          _
      $region14: #{elman_rnn_forward.1} parent=10 // pred_fallthru
        _
      // Predicated region
      $region15: #{elman_rnn_forward.1} parent=10 // pred_check
        %p19 = pneg %p15
      $region16: #{elman_rnn_forward.1} parent=10 // pred_check_branch
        %21 = sbr.rel (%p19) target = $region18
      $region17: #{elman_rnn_forward.1} parent=10 // pred_region
        %s22 = sshll.u32 1, 128
        %s23 = ssub.s32 %s22, 1
        loop: start=0, step=1, limit=1
        $region19: #{elman_rnn_forward.1} parent=17 // loop_pre_header
          _
        $region20: #{elman_rnn_forward.1} parent=17 // loop_header
          %s25 = sphi 0, %s29
          %p26 = scmp.ge.s32.totalorder %s25, 1
          %s30 = sphi %s1, %s1
          %s31 = sphi [#allocation3], [#allocation3]
        $region21: #{elman_rnn_forward.1} parent=17 // loop_header_branch
          %28 = sbr.rel (%p26) target = $region25
        $region22: #{elman_rnn_forward.1} parent=17 // loop_body
          %v32 = vld [vmem:[%s30] sm:%s23]
          %33 = vst [vmem:[%s31] sm:%s23] %v32
        $region23: #{elman_rnn_forward.1} parent=17 // loop_footer
          %s29 = sadd.s32 1, %s25
        $region24: #{elman_rnn_forward.1} parent=17 // loop_footer_branch
          %24 = sbr.rel target = $region20
        $region25: #{elman_rnn_forward.1} parent=17 // loop_exit
          _
      $region18: #{elman_rnn_forward.1} parent=10 // pred_fallthru
        _
      // Predicated region
      $region41: #{elman_rnn_forward.1} parent=10 // pred_check
        _
      $region42: #{elman_rnn_forward.1} parent=10 // pred_check_branch
        %85 = sbr.rel (0) target = $region44
      $region43: #{elman_rnn_forward.1} parent=10 // pred_region
        %86 = vsyncadd [#allocation4], 2048
      $region44: #{elman_rnn_forward.1} parent=10 // pred_fallthru
        _
      %s87 = smul.u32 128, 1
      %s88 = sshll.u32 %s87, 4
      %89 = dma.done [#allocation4], %s88
  $region9: #{elman_rnn_forward.1} parent=0 // pred_fallthru
    _
  %v90 = vld [vmem:[#allocation3] sm:$0xff]
  %v91 = vld [vmem:[#allocation3 + $0x8] sm:$0xff]
  %v92 = vld [vmem:[#allocation3 + $0x10] sm:$0xff]
  %v93 = vld [vmem:[#allocation3 + $0x18] sm:$0xff]
  %v94 = vld [vmem:[#allocation3 + $0x20] sm:$0xff]
  %v95 = vld [vmem:[#allocation3 + $0x28] sm:$0xff]
  %v96 = vld [vmem:[#allocation3 + $0x30] sm:$0xff]
  %v97 = vld [vmem:[#allocation3 + $0x38] sm:$0xff]
  %v98 = vld [vmem:[#allocation3 + $0x40] sm:$0xff]
  %v99 = vld [vmem:[#allocation3 + $0x48] sm:$0xff]
  %v100 = vld [vmem:[#allocation3 + $0x50] sm:$0xff]
  %v101 = vld [vmem:[#allocation3 + $0x58] sm:$0xff]
  %v102 = vld [vmem:[#allocation3 + $0x60] sm:$0xff]
  %v103 = vld [vmem:[#allocation3 + $0x68] sm:$0xff]
  %v104 = vld [vmem:[#allocation3 + $0x70] sm:$0xff]
  %v105 = vld [vmem:[#allocation3 + $0x78] sm:$0xff]
  %v106 = vld [vmem:[#allocation2] sm:$0x3]
  %v107 = vld [vmem:[%s0] sm:$0x3]
  %108 = vmatprep.subr.mxu0 0.0
  %109 = vmatpush1.msra.mxu0 %v105
  %110 = vmatprep.subr.mxu0 0.0
  %111 = vmatpush1.msra.mxu0 %v104
  %112 = vmatprep.subr.mxu0 0.0
  %113 = vmatpush1.msra.mxu0 %v103
  %114 = vmatprep.subr.mxu0 0.0
  %115 = vmatpush1.msra.mxu0 %v102
  %116 = vmatprep.subr.mxu0 0.0
  %117 = vmatpush1.msra.mxu0 %v101
  %118 = vmatprep.subr.mxu0 0.0
  %119 = vmatpush1.msra.mxu0 %v100
  %120 = vmatprep.subr.mxu0 0.0
  %121 = vmatpush1.msra.mxu0 %v99
  %122 = vmatprep.subr.mxu0 0.0
  %123 = vmatpush1.msra.mxu0 %v98
  %124 = vmatprep.subr.mxu0 0.0
  %125 = vmatpush1.msra.mxu0 %v97
  %126 = vmatprep.subr.mxu0 0.0
  %127 = vmatpush1.msra.mxu0 %v96
  %128 = vmatprep.subr.mxu0 0.0
  %129 = vmatpush1.msra.mxu0 %v95
  %130 = vmatprep.subr.mxu0 0.0
  %131 = vmatpush1.msra.mxu0 %v94
  %132 = vmatprep.subr.mxu0 0.0
  %133 = vmatpush1.msra.mxu0 %v93
  %134 = vmatprep.subr.mxu0 0.0
  %135 = vmatpush1.msra.mxu0 %v92
  %136 = vmatprep.subr.mxu0 0.0
  %137 = vmatpush1.msra.mxu0 %v91
  %138 = vmatprep.subr.mxu0 0.0
  %139 = vmatpush1.msra.mxu0 %v90
  %140 = vmatprep.subr.mxu0 0.0
  %141 = vmatpush2.msra.mxu0 0.0
  %142 = vmatprep.subr.mxu0 0.0
  %143 = vmatpush2.msra.mxu0 0.0
  %144 = vmatprep.subr.mxu0 0.0
  %145 = vmatpush2.msra.mxu0 0.0
  %146 = vmatprep.subr.mxu0 0.0
  %147 = vmatpush2.msra.mxu0 0.0
  %148 = vmatprep.subr.mxu0 0.0
  %149 = vmatpush2.msra.mxu0 0.0
  %150 = vmatprep.subr.mxu0 0.0
  %151 = vmatpush2.msra.mxu0 0.0
  %152 = vmatprep.subr.mxu0 0.0
  %153 = vmatpush2.msra.mxu0 0.0
  %154 = vmatprep.subr.mxu0 0.0
  %155 = vmatpush2.msra.mxu0 0.0
  %156 = vmatprep.subr.mxu0 0.0
  %157 = vmatpush2.msra.mxu0 0.0
  %158 = vmatprep.subr.mxu0 0.0
  %159 = vmatpush2.msra.mxu0 0.0
  %160 = vmatprep.subr.mxu0 0.0
  %161 = vmatpush2.msra.mxu0 0.0
  %162 = vmatprep.subr.mxu0 0.0
  %163 = vmatpush2.msra.mxu0 0.0
  %164 = vmatprep.subr.mxu0 0.0
  %165 = vmatpush2.msra.mxu0 0.0
  %166 = vmatprep.subr.mxu0 0.0
  %167 = vmatpush2.msra.mxu0 0.0
  %168 = vmatprep.subr.mxu0 0.0
  %169 = vmatpush2.msra.mxu0 0.0
  %170 = vmatprep.subr.mxu0 0.0
  %171 = vmatpush2.msra.mxu0 0.0
  %172 = vmatprep.mubr.f32.mxu0 0.0
  %173 = vmatmul.mubr.f32.gmra.mxu0 %v106
  %v174 = vpop.f32.mrf.mxu0
  %v175 = vadd.f32 0.0, %v174
  %v176 = vpop.f32.mrf.mxu0
  %177 = vdwg.mxu0
  %v178 = vadd.f32 %v107, %v175
  %v179 = vtanh.pop %v178
  %180 = vst [vmem:[%s2] sm:$0x3] %v179
  %s181 = scalar_lea.vmem %s0, 2
  %v182 = vld [vmem:[%s181] sm:$0x3]
  %183 = vmatprep.subr.mxu0 0.0
  %184 = vmatpush1.msra.mxu0 %v105
  %185 = vmatprep.subr.mxu0 0.0
  %186 = vmatpush1.msra.mxu0 %v104
  %187 = vmatprep.subr.mxu0 0.0
  %188 = vmatpush1.msra.mxu0 %v103
  %189 = vmatprep.subr.mxu0 0.0
  %190 = vmatpush1.msra.mxu0 %v102
  %191 = vmatprep.subr.mxu0 0.0
  %192 = vmatpush1.msra.mxu0 %v101
  %193 = vmatprep.subr.mxu0 0.0
  %194 = vmatpush1.msra.mxu0 %v100
  %195 = vmatprep.subr.mxu0 0.0
  %196 = vmatpush1.msra.mxu0 %v99
  %197 = vmatprep.subr.mxu0 0.0
  %198 = vmatpush1.msra.mxu0 %v98
  %199 = vmatprep.subr.mxu0 0.0
  %200 = vmatpush1.msra.mxu0 %v97
  %201 = vmatprep.subr.mxu0 0.0
  %202 = vmatpush1.msra.mxu0 %v96
  %203 = vmatprep.subr.mxu0 0.0
  %204 = vmatpush1.msra.mxu0 %v95
  %205 = vmatprep.subr.mxu0 0.0
  %206 = vmatpush1.msra.mxu0 %v94
  %207 = vmatprep.subr.mxu0 0.0
  %208 = vmatpush1.msra.mxu0 %v93
  %209 = vmatprep.subr.mxu0 0.0
  %210 = vmatpush1.msra.mxu0 %v92
  %211 = vmatprep.subr.mxu0 0.0
  %212 = vmatpush1.msra.mxu0 %v91
  %213 = vmatprep.subr.mxu0 0.0
  %214 = vmatpush1.msra.mxu0 %v90
  %215 = vmatprep.subr.mxu0 0.0
  %216 = vmatpush2.msra.mxu0 0.0
  %217 = vmatprep.subr.mxu0 0.0
  %218 = vmatpush2.msra.mxu0 0.0
  %219 = vmatprep.subr.mxu0 0.0
  %220 = vmatpush2.msra.mxu0 0.0
  %221 = vmatprep.subr.mxu0 0.0
  %222 = vmatpush2.msra.mxu0 0.0
  %223 = vmatprep.subr.mxu0 0.0
  %224 = vmatpush2.msra.mxu0 0.0
  %225 = vmatprep.subr.mxu0 0.0
  %226 = vmatpush2.msra.mxu0 0.0
  %227 = vmatprep.subr.mxu0 0.0
  %228 = vmatpush2.msra.mxu0 0.0
  %229 = vmatprep.subr.mxu0 0.0
  %230 = vmatpush2.msra.mxu0 0.0
  %231 = vmatprep.subr.mxu0 0.0
  %232 = vmatpush2.msra.mxu0 0.0
  %233 = vmatprep.subr.mxu0 0.0
  %234 = vmatpush2.msra.mxu0 0.0
  %235 = vmatprep.subr.mxu0 0.0
  %236 = vmatpush2.msra.mxu0 0.0
  %237 = vmatprep.subr.mxu0 0.0
  %238 = vmatpush2.msra.mxu0 0.0
  %239 = vmatprep.subr.mxu0 0.0
  %240 = vmatpush2.msra.mxu0 0.0
  %241 = vmatprep.subr.mxu0 0.0
  %242 = vmatpush2.msra.mxu0 0.0
  %243 = vmatprep.subr.mxu0 0.0
  %244 = vmatpush2.msra.mxu0 0.0
  %245 = vmatprep.subr.mxu0 0.0
  %246 = vmatpush2.msra.mxu0 0.0
  %247 = vmatprep.mubr.f32.mxu0 0.0
  %248 = vmatmul.mubr.f32.gmra.mxu0 %v179
  %v249 = vpop.f32.mrf.mxu0
  %v250 = vadd.f32 0.0, %v249
  %v251 = vpop.f32.mrf.mxu0
  %252 = vdwg.mxu0
  %v253 = vadd.f32 %v182, %v250
  %v254 = vtanh.pop %v253
  %s255 = scalar_lea.vmem %s2, 2
  %256 = vst [vmem:[%s255] sm:$0x3] %v254
  %s257 = scalar_lea.vmem %s0, 4
  %v258 = vld [vmem:[%s257] sm:$0x3]
  %259 = vmatprep.subr.mxu0 0.0
  %260 = vmatpush1.msra.mxu0 %v105
  %261 = vmatprep.subr.mxu0 0.0
  %262 = vmatpush1.msra.mxu0 %v104
  %263 = vmatprep.subr.mxu0 0.0
  %264 = vmatpush1.msra.mxu0 %v103
  %265 = vmatprep.subr.mxu0 0.0
  %266 = vmatpush1.msra.mxu0 %v102
  %267 = vmatprep.subr.mxu0 0.0
  %268 = vmatpush1.msra.mxu0 %v101
  %269 = vmatprep.subr.mxu0 0.0
  %270 = vmatpush1.msra.mxu0 %v100
  %271 = vmatprep.subr.mxu0 0.0
  %272 = vmatpush1.msra.mxu0 %v99
  %273 = vmatprep.subr.mxu0 0.0
  %274 = vmatpush1.msra.mxu0 %v98
  %275 = vmatprep.subr.mxu0 0.0
  %276 = vmatpush1.msra.mxu0 %v97
  %277 = vmatprep.subr.mxu0 0.0
  %278 = vmatpush1.msra.mxu0 %v96
  %279 = vmatprep.subr.mxu0 0.0
  %280 = vmatpush1.msra.mxu0 %v95
  %281 = vmatprep.subr.mxu0 0.0
  %282 = vmatpush1.msra.mxu0 %v94
  %283 = vmatprep.subr.mxu0 0.0
  %284 = vmatpush1.msra.mxu0 %v93
  %285 = vmatprep.subr.mxu0 0.0
  %286 = vmatpush1.msra.mxu0 %v92
  %287 = vmatprep.subr.mxu0 0.0
  %288 = vmatpush1.msra.mxu0 %v91
  %289 = vmatprep.subr.mxu0 0.0
  %290 = vmatpush1.msra.mxu0 %v90
  %291 = vmatprep.subr.mxu0 0.0
  %292 = vmatpush2.msra.mxu0 0.0
  %293 = vmatprep.subr.mxu0 0.0
  %294 = vmatpush2.msra.mxu0 0.0
  %295 = vmatprep.subr.mxu0 0.0
  %296 = vmatpush2.msra.mxu0 0.0
  %297 = vmatprep.subr.mxu0 0.0
  %298 = vmatpush2.msra.mxu0 0.0
  %299 = vmatprep.subr.mxu0 0.0
  %300 = vmatpush2.msra.mxu0 0.0
  %301 = vmatprep.subr.mxu0 0.0
  %302 = vmatpush2.msra.mxu0 0.0
  %303 = vmatprep.subr.mxu0 0.0
  %304 = vmatpush2.msra.mxu0 0.0
  %305 = vmatprep.subr.mxu0 0.0
  %306 = vmatpush2.msra.mxu0 0.0
  %307 = vmatprep.subr.mxu0 0.0
  %308 = vmatpush2.msra.mxu0 0.0
  %309 = vmatprep.subr.mxu0 0.0
  %310 = vmatpush2.msra.mxu0 0.0
  %311 = vmatprep.subr.mxu0 0.0
  %312 = vmatpush2.msra.mxu0 0.0
  %313 = vmatprep.subr.mxu0 0.0
  %314 = vmatpush2.msra.mxu0 0.0
  %315 = vmatprep.subr.mxu0 0.0
  %316 = vmatpush2.msra.mxu0 0.0
  %317 = vmatprep.subr.mxu0 0.0
  %318 = vmatpush2.msra.mxu0 0.0
  %319 = vmatprep.subr.mxu0 0.0
  %320 = vmatpush2.msra.mxu0 0.0
  %321 = vmatprep.subr.mxu0 0.0
  %322 = vmatpush2.msra.mxu0 0.0
  %323 = vmatprep.mubr.f32.mxu0 0.0
  %324 = vmatmul.mubr.f32.gmra.mxu0 %v254
  %v325 = vpop.f32.mrf.mxu0
  %v326 = vadd.f32 0.0, %v325
  %v327 = vpop.f32.mrf.mxu0
  %328 = vdwg.mxu0
  %v329 = vadd.f32 %v258, %v326
  %v330 = vtanh.pop %v329
  %s331 = scalar_lea.vmem %s2, 4
  %332 = vst [vmem:[%s331] sm:$0x3] %v330
  %s333 = scalar_lea.vmem %s0, 6
  %v334 = vld [vmem:[%s333] sm:$0x3]
  %335 = vmatprep.subr.mxu0 0.0
  %336 = vmatpush1.msra.mxu0 %v105
  %337 = vmatprep.subr.mxu0 0.0
  %338 = vmatpush1.msra.mxu0 %v104
  %339 = vmatprep.subr.mxu0 0.0
  %340 = vmatpush1.msra.mxu0 %v103
  %341 = vmatprep.subr.mxu0 0.0
  %342 = vmatpush1.msra.mxu0 %v102
  %343 = vmatprep.subr.mxu0 0.0
  %344 = vmatpush1.msra.mxu0 %v101
  %345 = vmatprep.subr.mxu0 0.0
  %346 = vmatpush1.msra.mxu0 %v100
  %347 = vmatprep.subr.mxu0 0.0
  %348 = vmatpush1.msra.mxu0 %v99
  %349 = vmatprep.subr.mxu0 0.0
  %350 = vmatpush1.msra.mxu0 %v98
  %351 = vmatprep.subr.mxu0 0.0
  %352 = vmatpush1.msra.mxu0 %v97
  %353 = vmatprep.subr.mxu0 0.0
  %354 = vmatpush1.msra.mxu0 %v96
  %355 = vmatprep.subr.mxu0 0.0
  %356 = vmatpush1.msra.mxu0 %v95
  %357 = vmatprep.subr.mxu0 0.0
  %358 = vmatpush1.msra.mxu0 %v94
  %359 = vmatprep.subr.mxu0 0.0
  %360 = vmatpush1.msra.mxu0 %v93
  %361 = vmatprep.subr.mxu0 0.0
  %362 = vmatpush1.msra.mxu0 %v92
  %363 = vmatprep.subr.mxu0 0.0
  %364 = vmatpush1.msra.mxu0 %v91
  %365 = vmatprep.subr.mxu0 0.0
  %366 = vmatpush1.msra.mxu0 %v90
  %367 = vmatprep.subr.mxu0 0.0
  %368 = vmatpush2.msra.mxu0 0.0
  %369 = vmatprep.subr.mxu0 0.0
  %370 = vmatpush2.msra.mxu0 0.0
  %371 = vmatprep.subr.mxu0 0.0
  %372 = vmatpush2.msra.mxu0 0.0
  %373 = vmatprep.subr.mxu0 0.0
  %374 = vmatpush2.msra.mxu0 0.0
  %375 = vmatprep.subr.mxu0 0.0
  %376 = vmatpush2.msra.mxu0 0.0
  %377 = vmatprep.subr.mxu0 0.0
  %378 = vmatpush2.msra.mxu0 0.0
  %379 = vmatprep.subr.mxu0 0.0
  %380 = vmatpush2.msra.mxu0 0.0
  %381 = vmatprep.subr.mxu0 0.0
  %382 = vmatpush2.msra.mxu0 0.0
  %383 = vmatprep.subr.mxu0 0.0
  %384 = vmatpush2.msra.mxu0 0.0
  %385 = vmatprep.subr.mxu0 0.0
  %386 = vmatpush2.msra.mxu0 0.0
  %387 = vmatprep.subr.mxu0 0.0
  %388 = vmatpush2.msra.mxu0 0.0
  %389 = vmatprep.subr.mxu0 0.0
  %390 = vmatpush2.msra.mxu0 0.0
  %391 = vmatprep.subr.mxu0 0.0
  %392 = vmatpush2.msra.mxu0 0.0
  %393 = vmatprep.subr.mxu0 0.0
  %394 = vmatpush2.msra.mxu0 0.0
  %395 = vmatprep.subr.mxu0 0.0
  %396 = vmatpush2.msra.mxu0 0.0
  %397 = vmatprep.subr.mxu0 0.0
  %398 = vmatpush2.msra.mxu0 0.0
  %399 = vmatprep.mubr.f32.mxu0 0.0
  %400 = vmatmul.mubr.f32.gmra.mxu0 %v330
  %v401 = vpop.f32.mrf.mxu0
  %v402 = vadd.f32 0.0, %v401
  %v403 = vpop.f32.mrf.mxu0
  %404 = vdwg.mxu0
  %v405 = vadd.f32 %v334, %v402
  %v406 = vtanh.pop %v405
  %s407 = scalar_lea.vmem %s2, 6
  %408 = vst [vmem:[%s407] sm:$0x3] %v406
  %s409 = scalar_lea.vmem %s0, 8
  %v410 = vld [vmem:[%s409] sm:$0x3]
  %411 = vmatprep.subr.mxu0 0.0
  %412 = vmatpush1.msra.mxu0 %v105
  %413 = vmatprep.subr.mxu0 0.0
  %414 = vmatpush1.msra.mxu0 %v104
  %415 = vmatprep.subr.mxu0 0.0
  %416 = vmatpush1.msra.mxu0 %v103
  %417 = vmatprep.subr.mxu0 0.0
  %418 = vmatpush1.msra.mxu0 %v102
  %419 = vmatprep.subr.mxu0 0.0
  %420 = vmatpush1.msra.mxu0 %v101
  %421 = vmatprep.subr.mxu0 0.0
  %422 = vmatpush1.msra.mxu0 %v100
  %423 = vmatprep.subr.mxu0 0.0
  %424 = vmatpush1.msra.mxu0 %v99
  %425 = vmatprep.subr.mxu0 0.0
  %426 = vmatpush1.msra.mxu0 %v98
  %427 = vmatprep.subr.mxu0 0.0
  %428 = vmatpush1.msra.mxu0 %v97
  %429 = vmatprep.subr.mxu0 0.0
  %430 = vmatpush1.msra.mxu0 %v96
  %431 = vmatprep.subr.mxu0 0.0
  %432 = vmatpush1.msra.mxu0 %v95
  %433 = vmatprep.subr.mxu0 0.0
  %434 = vmatpush1.msra.mxu0 %v94
  %435 = vmatprep.subr.mxu0 0.0
  %436 = vmatpush1.msra.mxu0 %v93
  %437 = vmatprep.subr.mxu0 0.0
  %438 = vmatpush1.msra.mxu0 %v92
  %439 = vmatprep.subr.mxu0 0.0
  %440 = vmatpush1.msra.mxu0 %v91
  %441 = vmatprep.subr.mxu0 0.0
  %442 = vmatpush1.msra.mxu0 %v90
  %443 = vmatprep.subr.mxu0 0.0
  %444 = vmatpush2.msra.mxu0 0.0
  %445 = vmatprep.subr.mxu0 0.0
  %446 = vmatpush2.msra.mxu0 0.0
  %447 = vmatprep.subr.mxu0 0.0
  %448 = vmatpush2.msra.mxu0 0.0
  %449 = vmatprep.subr.mxu0 0.0
  %450 = vmatpush2.msra.mxu0 0.0
  %451 = vmatprep.subr.mxu0 0.0
  %452 = vmatpush2.msra.mxu0 0.0
  %453 = vmatprep.subr.mxu0 0.0
  %454 = vmatpush2.msra.mxu0 0.0
  %455 = vmatprep.subr.mxu0 0.0
  %456 = vmatpush2.msra.mxu0 0.0
  %457 = vmatprep.subr.mxu0 0.0
  %458 = vmatpush2.msra.mxu0 0.0
  %459 = vmatprep.subr.mxu0 0.0
  %460 = vmatpush2.msra.mxu0 0.0
  %461 = vmatprep.subr.mxu0 0.0
  %462 = vmatpush2.msra.mxu0 0.0
  %463 = vmatprep.subr.mxu0 0.0
  %464 = vmatpush2.msra.mxu0 0.0
  %465 = vmatprep.subr.mxu0 0.0
  %466 = vmatpush2.msra.mxu0 0.0
  %467 = vmatprep.subr.mxu0 0.0
  %468 = vmatpush2.msra.mxu0 0.0
  %469 = vmatprep.subr.mxu0 0.0
  %470 = vmatpush2.msra.mxu0 0.0
  %471 = vmatprep.subr.mxu0 0.0
  %472 = vmatpush2.msra.mxu0 0.0
  %473 = vmatprep.subr.mxu0 0.0
  %474 = vmatpush2.msra.mxu0 0.0
  %475 = vmatprep.mubr.f32.mxu0 0.0
  %476 = vmatmul.mubr.f32.gmra.mxu0 %v406
  %v477 = vpop.f32.mrf.mxu0
  %v478 = vadd.f32 0.0, %v477
  %v479 = vpop.f32.mrf.mxu0
  %480 = vdwg.mxu0
  %v481 = vadd.f32 %v410, %v478
  %v482 = vtanh.pop %v481
  %s483 = scalar_lea.vmem %s2, 8
  %484 = vst [vmem:[%s483] sm:$0x3] %v482
  %s485 = scalar_lea.vmem %s0, 10
  %v486 = vld [vmem:[%s485] sm:$0x3]
  %487 = vmatprep.subr.mxu0 0.0
  %488 = vmatpush1.msra.mxu0 %v105
  %489 = vmatprep.subr.mxu0 0.0
  %490 = vmatpush1.msra.mxu0 %v104
  %491 = vmatprep.subr.mxu0 0.0
  %492 = vmatpush1.msra.mxu0 %v103
  %493 = vmatprep.subr.mxu0 0.0
  %494 = vmatpush1.msra.mxu0 %v102
  %495 = vmatprep.subr.mxu0 0.0
  %496 = vmatpush1.msra.mxu0 %v101
  %497 = vmatprep.subr.mxu0 0.0
  %498 = vmatpush1.msra.mxu0 %v100
  %499 = vmatprep.subr.mxu0 0.0
  %500 = vmatpush1.msra.mxu0 %v99
  %501 = vmatprep.subr.mxu0 0.0
  %502 = vmatpush1.msra.mxu0 %v98
  %503 = vmatprep.subr.mxu0 0.0
  %504 = vmatpush1.msra.mxu0 %v97
  %505 = vmatprep.subr.mxu0 0.0
  %506 = vmatpush1.msra.mxu0 %v96
  %507 = vmatprep.subr.mxu0 0.0
  %508 = vmatpush1.msra.mxu0 %v95
  %509 = vmatprep.subr.mxu0 0.0
  %510 = vmatpush1.msra.mxu0 %v94
  %511 = vmatprep.subr.mxu0 0.0
  %512 = vmatpush1.msra.mxu0 %v93
  %513 = vmatprep.subr.mxu0 0.0
  %514 = vmatpush1.msra.mxu0 %v92
  %515 = vmatprep.subr.mxu0 0.0
  %516 = vmatpush1.msra.mxu0 %v91
  %517 = vmatprep.subr.mxu0 0.0
  %518 = vmatpush1.msra.mxu0 %v90
  %519 = vmatprep.subr.mxu0 0.0
  %520 = vmatpush2.msra.mxu0 0.0
  %521 = vmatprep.subr.mxu0 0.0
  %522 = vmatpush2.msra.mxu0 0.0
  %523 = vmatprep.subr.mxu0 0.0
  %524 = vmatpush2.msra.mxu0 0.0
  %525 = vmatprep.subr.mxu0 0.0
  %526 = vmatpush2.msra.mxu0 0.0
  %527 = vmatprep.subr.mxu0 0.0
  %528 = vmatpush2.msra.mxu0 0.0
  %529 = vmatprep.subr.mxu0 0.0
  %530 = vmatpush2.msra.mxu0 0.0
  %531 = vmatprep.subr.mxu0 0.0
  %532 = vmatpush2.msra.mxu0 0.0
  %533 = vmatprep.subr.mxu0 0.0
  %534 = vmatpush2.msra.mxu0 0.0
  %535 = vmatprep.subr.mxu0 0.0
  %536 = vmatpush2.msra.mxu0 0.0
  %537 = vmatprep.subr.mxu0 0.0
  %538 = vmatpush2.msra.mxu0 0.0
  %539 = vmatprep.subr.mxu0 0.0
  %540 = vmatpush2.msra.mxu0 0.0
  %541 = vmatprep.subr.mxu0 0.0
  %542 = vmatpush2.msra.mxu0 0.0
  %543 = vmatprep.subr.mxu0 0.0
  %544 = vmatpush2.msra.mxu0 0.0
  %545 = vmatprep.subr.mxu0 0.0
  %546 = vmatpush2.msra.mxu0 0.0
  %547 = vmatprep.subr.mxu0 0.0
  %548 = vmatpush2.msra.mxu0 0.0
  %549 = vmatprep.subr.mxu0 0.0
  %550 = vmatpush2.msra.mxu0 0.0
  %551 = vmatprep.mubr.f32.mxu0 0.0
  %552 = vmatmul.mubr.f32.gmra.mxu0 %v482
  %v553 = vpop.f32.mrf.mxu0
  %v554 = vadd.f32 0.0, %v553
  %v555 = vpop.f32.mrf.mxu0
  %556 = vdwg.mxu0
  %v557 = vadd.f32 %v486, %v554
  %v558 = vtanh.pop %v557
  %s559 = scalar_lea.vmem %s2, 10
  %560 = vst [vmem:[%s559] sm:$0x3] %v558
  %s561 = scalar_lea.vmem %s0, 12
  %v562 = vld [vmem:[%s561] sm:$0x3]
  %563 = vmatprep.subr.mxu0 0.0
  %564 = vmatpush1.msra.mxu0 %v105
  %565 = vmatprep.subr.mxu0 0.0
  %566 = vmatpush1.msra.mxu0 %v104
  %567 = vmatprep.subr.mxu0 0.0
  %568 = vmatpush1.msra.mxu0 %v103
  %569 = vmatprep.subr.mxu0 0.0
  %570 = vmatpush1.msra.mxu0 %v102
  %571 = vmatprep.subr.mxu0 0.0
  %572 = vmatpush1.msra.mxu0 %v101
  %573 = vmatprep.subr.mxu0 0.0
  %574 = vmatpush1.msra.mxu0 %v100
  %575 = vmatprep.subr.mxu0 0.0
  %576 = vmatpush1.msra.mxu0 %v99
  %577 = vmatprep.subr.mxu0 0.0
  %578 = vmatpush1.msra.mxu0 %v98
  %579 = vmatprep.subr.mxu0 0.0
  %580 = vmatpush1.msra.mxu0 %v97
  %581 = vmatprep.subr.mxu0 0.0
  %582 = vmatpush1.msra.mxu0 %v96
  %583 = vmatprep.subr.mxu0 0.0
  %584 = vmatpush1.msra.mxu0 %v95
  %585 = vmatprep.subr.mxu0 0.0
  %586 = vmatpush1.msra.mxu0 %v94
  %587 = vmatprep.subr.mxu0 0.0
  %588 = vmatpush1.msra.mxu0 %v93
  %589 = vmatprep.subr.mxu0 0.0
  %590 = vmatpush1.msra.mxu0 %v92
  %591 = vmatprep.subr.mxu0 0.0
  %592 = vmatpush1.msra.mxu0 %v91
  %593 = vmatprep.subr.mxu0 0.0
  %594 = vmatpush1.msra.mxu0 %v90
  %595 = vmatprep.subr.mxu0 0.0
  %596 = vmatpush2.msra.mxu0 0.0
  %597 = vmatprep.subr.mxu0 0.0
  %598 = vmatpush2.msra.mxu0 0.0
  %599 = vmatprep.subr.mxu0 0.0
  %600 = vmatpush2.msra.mxu0 0.0
  %601 = vmatprep.subr.mxu0 0.0
  %602 = vmatpush2.msra.mxu0 0.0
  %603 = vmatprep.subr.mxu0 0.0
  %604 = vmatpush2.msra.mxu0 0.0
  %605 = vmatprep.subr.mxu0 0.0
  %606 = vmatpush2.msra.mxu0 0.0
  %607 = vmatprep.subr.mxu0 0.0
  %608 = vmatpush2.msra.mxu0 0.0
  %609 = vmatprep.subr.mxu0 0.0
  %610 = vmatpush2.msra.mxu0 0.0
  %611 = vmatprep.subr.mxu0 0.0
  %612 = vmatpush2.msra.mxu0 0.0
  %613 = vmatprep.subr.mxu0 0.0
  %614 = vmatpush2.msra.mxu0 0.0
  %615 = vmatprep.subr.mxu0 0.0
  %616 = vmatpush2.msra.mxu0 0.0
  %617 = vmatprep.subr.mxu0 0.0
  %618 = vmatpush2.msra.mxu0 0.0
  %619 = vmatprep.subr.mxu0 0.0
  %620 = vmatpush2.msra.mxu0 0.0
  %621 = vmatprep.subr.mxu0 0.0
  %622 = vmatpush2.msra.mxu0 0.0
  %623 = vmatprep.subr.mxu0 0.0
  %624 = vmatpush2.msra.mxu0 0.0
  %625 = vmatprep.subr.mxu0 0.0
  %626 = vmatpush2.msra.mxu0 0.0
  %627 = vmatprep.mubr.f32.mxu0 0.0
  %628 = vmatmul.mubr.f32.gmra.mxu0 %v558
  %v629 = vpop.f32.mrf.mxu0
  %v630 = vadd.f32 0.0, %v629
  %v631 = vpop.f32.mrf.mxu0
  %632 = vdwg.mxu0
  %v633 = vadd.f32 %v562, %v630
  %v634 = vtanh.pop %v633
  %s635 = scalar_lea.vmem %s2, 12
  %636 = vst [vmem:[%s635] sm:$0x3] %v634
  %s637 = scalar_lea.vmem %s0, 14
  %v638 = vld [vmem:[%s637] sm:$0x3]
  %639 = vmatprep.subr.mxu0 0.0
  %640 = vmatpush1.msra.mxu0 %v105
  %641 = vmatprep.subr.mxu0 0.0
  %642 = vmatpush1.msra.mxu0 %v104
  %643 = vmatprep.subr.mxu0 0.0
  %644 = vmatpush1.msra.mxu0 %v103
  %645 = vmatprep.subr.mxu0 0.0
  %646 = vmatpush1.msra.mxu0 %v102
  %647 = vmatprep.subr.mxu0 0.0
  %648 = vmatpush1.msra.mxu0 %v101
  %649 = vmatprep.subr.mxu0 0.0
  %650 = vmatpush1.msra.mxu0 %v100
  %651 = vmatprep.subr.mxu0 0.0
  %652 = vmatpush1.msra.mxu0 %v99
  %653 = vmatprep.subr.mxu0 0.0
  %654 = vmatpush1.msra.mxu0 %v98
  %655 = vmatprep.subr.mxu0 0.0
  %656 = vmatpush1.msra.mxu0 %v97
  %657 = vmatprep.subr.mxu0 0.0
  %658 = vmatpush1.msra.mxu0 %v96
  %659 = vmatprep.subr.mxu0 0.0
  %660 = vmatpush1.msra.mxu0 %v95
  %661 = vmatprep.subr.mxu0 0.0
  %662 = vmatpush1.msra.mxu0 %v94
  %663 = vmatprep.subr.mxu0 0.0
  %664 = vmatpush1.msra.mxu0 %v93
  %665 = vmatprep.subr.mxu0 0.0
  %666 = vmatpush1.msra.mxu0 %v92
  %667 = vmatprep.subr.mxu0 0.0
  %668 = vmatpush1.msra.mxu0 %v91
  %669 = vmatprep.subr.mxu0 0.0
  %670 = vmatpush1.msra.mxu0 %v90
  %671 = vmatprep.subr.mxu0 0.0
  %672 = vmatpush2.msra.mxu0 0.0
  %673 = vmatprep.subr.mxu0 0.0
  %674 = vmatpush2.msra.mxu0 0.0
  %675 = vmatprep.subr.mxu0 0.0
  %676 = vmatpush2.msra.mxu0 0.0
  %677 = vmatprep.subr.mxu0 0.0
  %678 = vmatpush2.msra.mxu0 0.0
  %679 = vmatprep.subr.mxu0 0.0
  %680 = vmatpush2.msra.mxu0 0.0
  %681 = vmatprep.subr.mxu0 0.0
  %682 = vmatpush2.msra.mxu0 0.0
  %683 = vmatprep.subr.mxu0 0.0
  %684 = vmatpush2.msra.mxu0 0.0
  %685 = vmatprep.subr.mxu0 0.0
  %686 = vmatpush2.msra.mxu0 0.0
  %687 = vmatprep.subr.mxu0 0.0
  %688 = vmatpush2.msra.mxu0 0.0
  %689 = vmatprep.subr.mxu0 0.0
  %690 = vmatpush2.msra.mxu0 0.0
  %691 = vmatprep.subr.mxu0 0.0
  %692 = vmatpush2.msra.mxu0 0.0
  %693 = vmatprep.subr.mxu0 0.0
  %694 = vmatpush2.msra.mxu0 0.0
  %695 = vmatprep.subr.mxu0 0.0
  %696 = vmatpush2.msra.mxu0 0.0
  %697 = vmatprep.subr.mxu0 0.0
  %698 = vmatpush2.msra.mxu0 0.0
  %699 = vmatprep.subr.mxu0 0.0
  %700 = vmatpush2.msra.mxu0 0.0
  %701 = vmatprep.subr.mxu0 0.0
  %702 = vmatpush2.msra.mxu0 0.0
  %703 = vmatprep.mubr.f32.mxu0 0.0
  %704 = vmatmul.mubr.f32.gmra.mxu0 %v634
  %v705 = vpop.f32.mrf.mxu0
  %v706 = vadd.f32 0.0, %v705
  %v707 = vpop.f32.mrf.mxu0
  %708 = vdwg.mxu0
  %v709 = vadd.f32 %v638, %v706
  %v710 = vtanh.pop %v709
  %s711 = scalar_lea.vmem %s2, 14
  %712 = vst [vmem:[%s711] sm:$0x3] %v710
  %713 = vst [vmem:[#allocation2] sm:$0x3] %v710
  // Predicated region
  $region45: #{elman_rnn_forward.1} parent=0 // pred_check
    _
  $region46: #{elman_rnn_forward.1} parent=0 // pred_check_branch
    %715 = sbr.rel (0) target = $region48
  $region47: #{elman_rnn_forward.1} parent=0 // pred_region
    _
  $region48: #{elman_rnn_forward.1} parent=0 // pred_fallthru
    _
  // Predicated region
  $region49: #{elman_rnn_forward.1} parent=0 // pred_check
    _
  $region50: #{elman_rnn_forward.1} parent=0 // pred_check_branch
    %717 = sbr.rel (0) target = $region52
  $region51: #{elman_rnn_forward.1} parent=0 // pred_region
    _
  $region52: #{elman_rnn_forward.1} parent=0 // pred_fallthru
    _

</llo_original>
